<compile_context>
chip_gen: v5e
topology: v5e:2x2
jax: 0.10.0
libtpu: 0.0.40
codegen_flags: <defaults>
</compile_context>

<pallas_src>
import functools

import jax
import jax.numpy as jnp
from jax.experimental import pallas as pl
from jax.experimental.pallas import tpu as pltpu


def _ce_label_smooth_kernel(logits_ref, targets_ref, partial_ref, *,
                            epsilon: float, num_classes: int,
                            batch: int, tile_n: int):
    """Writes the un-normalized partial loss sum for one row block.

    logits_ref : (tile_n, C)   native dtype, upcast to f32 inside
    targets_ref: (tile_n, 1)   int32 class indices
    partial_ref: (1, 8, 128)   f32 -- block partial, broadcast across the tile
    """
    i = pl.program_id(0)

    x = logits_ref[...].astype(jnp.float32)                     # (tile_n, C)
    tgt = targets_ref[...]                                       # (tile_n, 1)

    # Numerically stable log-softmax pieces.
    row_max = jnp.max(x, axis=1, keepdims=True)                  # (tile_n, 1)
    shifted = x - row_max                                        # (tile_n, C)
    lse = jnp.log(jnp.sum(jnp.exp(shifted), axis=1, keepdims=True))

    # Fused smoothing term: single weighted cross-lane reduction.
    # class_ids stays (1, C); the compare broadcasts against tgt (tile_n, 1).
    class_ids = jax.lax.broadcasted_iota(jnp.int32, (1, num_classes), 1)
    w_hit = (1.0 - epsilon) + epsilon / num_classes
    w_miss = epsilon / num_classes
    weights = jnp.where(class_ids == tgt, w_hit, w_miss)         # (tile_n, C)
    smooth = jnp.sum(weights * shifted, axis=1, keepdims=True)   # (tile_n, 1)

    # Closed-form per-row loss (sum of weights is exactly 1).
    loss_rows = lse - smooth                                     # (tile_n, 1)

    # Mask rows beyond the true batch (padded final block may contain garbage;
    # where() does not propagate NaN/Inf from the unselected branch).
    row_ids = i * tile_n + jax.lax.broadcasted_iota(jnp.int32, (tile_n, 1), 0)
    loss_rows = jnp.where(row_ids < batch, loss_rows, 0.0)

    block_sum = jnp.sum(loss_rows)                               # scalar f32
    partial_ref[...] = jnp.broadcast_to(block_sum, (1, 8, 128))


# 48 MiB: under v7x's 64 MiB physical VMEM per TensorCore, well above the
# 16/32 MiB scoped defaults on v5e/v6e.
_VMEM_LIMIT_BYTES = 48 * 1024 * 1024
# Target working set per grid step (2x headroom under the limit above).
_WORKING_SET_BYTES = 24 * 1024 * 1024


def _choose_tile_n(n: int, c: int, itemsize: int) -> int:
    """Row-block size governed purely by the VMEM byte budget."""
    # Packed-sublane multiple: 8 for f32, 16 for bf16, 32 for int8/fp8.
    sub = 8 * max(1, 4 // max(1, itemsize))
    # Per-row cost: 2x double-buffered native input block + ~4 f32-sized
    # full-tile temporaries created by the in-kernel upcast/exp/weights.
    bytes_per_row = c * (2 * itemsize + 4 * 4)
    max_rows = max(sub, _WORKING_SET_BYTES // max(1, bytes_per_row))
    if n <= max_rows:
        return n                                   # one block == full dim (legal)
    return max(sub, (max_rows // sub) * sub)       # sublane-multiple tile


def cross_entropy_label_smooth(logits: jax.Array,
                               targets: jax.Array,
                               epsilon: float) -> jax.Array:
    """Pallas-backed equivalent of CrossEntropyLabelSmooth.forward."""
    n, c = logits.shape
    targets_2d = targets.reshape(n, 1).astype(jnp.int32)

    tile_n = _choose_tile_n(n, c, logits.dtype.itemsize)
    num_blocks = pl.cdiv(n, tile_n)

    kernel = functools.partial(
        _ce_label_smooth_kernel,
        epsilon=float(epsilon),
        num_classes=int(c),
        batch=int(n),
        tile_n=int(tile_n),
    )

    # TODO(synk): for vocab-scale C (>=32K) add a second "arbitrary" grid axis
    # over the class dimension with online-LSE accumulators in VMEM scratch.
    partials = pl.pallas_call(
        kernel,
        out_shape=jax.ShapeDtypeStruct((num_blocks, 8, 128), jnp.float32),
        grid=(num_blocks,),
        in_specs=[
            pl.BlockSpec((tile_n, c), lambda i: (i, 0)),        # logits block
            pl.BlockSpec((tile_n, 1), lambda i: (i, 0)),        # targets block
        ],
        out_specs=pl.BlockSpec((1, 8, 128), lambda i: (i, 0, 0)),
        compiler_params=pltpu.CompilerParams(
            dimension_semantics=("parallel",),
            vmem_limit_bytes=_VMEM_LIMIT_BYTES),
    )(logits, targets_2d)

    # Tiny final reduction + mean over the *true* batch in plain JAX.
    return jnp.sum(partials[:, 0, 0]) / float(n)


def _reference(logits, targets, epsilon):
    n, c = logits.shape
    log_probs = jax.nn.log_softmax(logits.astype(jnp.float32), axis=1)
    onehot = jax.nn.one_hot(targets, c, dtype=jnp.float32)
    smooth = (1.0 - epsilon) * onehot + epsilon / c
    return jnp.sum(jnp.mean(-smooth * log_probs, axis=0))


if __name__ == "__main__":
    epsilon = 0.1
    key = jax.random.PRNGKey(0)

    # Case 1: matches the module's canonical small classification setup.
    k1, k2, k3, k4 = jax.random.split(key, 4)
    logits = jax.random.normal(k1, (8, 16), dtype=jnp.float32)
    targets = jax.random.randint(k2, (8,), 0, 16, dtype=jnp.int32)
    loss = cross_entropy_label_smooth(logits, targets, epsilon)
    jax.block_until_ready(loss)
    ref = _reference(logits, targets, epsilon)
    assert jnp.allclose(loss, ref, atol=1e-5, rtol=1e-5), (loss, ref)

    # Case 2: bf16 logits, odd (non-multiple-of-8) shapes.
    logits_bf = (jax.random.normal(k3, (13, 37), dtype=jnp.float32)
                 .astype(jnp.bfloat16))
    targets_bf = jax.random.randint(k4, (13,), 0, 37, dtype=jnp.int32)
    loss_bf = cross_entropy_label_smooth(logits_bf, targets_bf, epsilon)
    jax.block_until_ready(loss_bf)
    ref_bf = _reference(logits_bf, targets_bf, epsilon)
    assert jnp.allclose(loss_bf, ref_bf, atol=1e-4, rtol=1e-4), (loss_bf, ref_bf)

    print("KERNEL_OK")
</pallas_src>

<mosaic_0001>
module attributes {stable_mosaic.version = 11 : i64} {
  func.func @_ce_label_smooth_kernel(%arg0: i32, %arg1: memref<8x16xf32, #tpu.memory_space<vmem>>, %arg2: memref<8x1xi32, #tpu.memory_space<vmem>>, %arg3: memref<1x8x128xf32, #tpu.memory_space<vmem>>) attributes {dimension_semantics = [#tpu.dimension_semantics<parallel>], iteration_bounds = array<i64: 1>, scalar_prefetch = 0 : i64, scratch_operands = 0 : i64, tpu.core_type = #tpu.core_type<tc>, window_params = [{transform_indices = @transform_0, window_bounds = array<i64: 8, 16>}, {transform_indices = @transform_1, window_bounds = array<i64: 8, 1>}, {transform_indices = @transform_2, window_bounds = array<i64: 1, 8, 128>}]} {
    %c0 = arith.constant 0 : index
    %c0_0 = arith.constant 0 : index
    %0 = vector.load %arg1[%c0, %c0_0] : memref<8x16xf32, #tpu.memory_space<vmem>>, vector<8x16xf32>
    %c0_1 = arith.constant 0 : index
    %c0_2 = arith.constant 0 : index
    %1 = vector.load %arg2[%c0_1, %c0_2] : memref<8x1xi32, #tpu.memory_space<vmem>>, vector<8x1xi32>
    %cst = arith.constant dense<0xFF800000> : vector<8xf32>
    %2 = vector.multi_reduction <maximumf>, %0, %cst [1] : vector<8x16xf32> to vector<8xf32>
    %3 = vector.shape_cast %2 : vector<8xf32> to vector<8x1xf32>
    %4 = vector.broadcast %3 : vector<8x1xf32> to vector<8x16xf32>
    %5 = arith.subf %0, %4 : vector<8x16xf32>
    %6 = math.exp %5 : vector<8x16xf32>
    %cst_3 = arith.constant dense<0.000000e+00> : vector<8xf32>
    %7 = vector.multi_reduction <add>, %6, %cst_3 [1] : vector<8x16xf32> to vector<8xf32>
    %8 = vector.shape_cast %7 : vector<8xf32> to vector<8x1xf32>
    %9 = math.log %8 : vector<8x1xf32>
    %10 = tpu.iota {dimensions = array<i32: 1>} : vector<1x16xi32>
    %11 = vector.broadcast %10 : vector<1x16xi32> to vector<8x16xi32>
    %12 = vector.broadcast %1 : vector<8x1xi32> to vector<8x16xi32>
    %13 = arith.cmpi eq, %11, %12 : vector<8x16xi32>
    %cst_4 = arith.constant 9.062500e-01 : f32
    %cst_5 = arith.constant 6.250000e-03 : f32
    %14 = vector.broadcast %cst_4 : f32 to vector<8x16xf32>
    %15 = vector.broadcast %cst_5 : f32 to vector<8x16xf32>
    %16 = arith.select %13, %14, %15 : vector<8x16xi1>, vector<8x16xf32>
    %17 = arith.mulf %16, %5 : vector<8x16xf32>
    %cst_6 = arith.constant dense<0.000000e+00> : vector<8xf32>
    %18 = vector.multi_reduction <add>, %17, %cst_6 [1] : vector<8x16xf32> to vector<8xf32>
    %19 = vector.shape_cast %18 : vector<8xf32> to vector<8x1xf32>
    %20 = arith.subf %9, %19 : vector<8x1xf32>
    %c8_i32 = arith.constant 8 : i32
    %21 = arith.muli %arg0, %c8_i32 : i32
    %22 = tpu.iota {dimensions = array<i32: 0>} : vector<8x1xi32>
    %23 = vector.broadcast %21 : i32 to vector<8x1xi32>
    %24 = arith.addi %23, %22 : vector<8x1xi32>
    %c8_i32_7 = arith.constant 8 : i32
    %25 = vector.broadcast %c8_i32_7 : i32 to vector<8x1xi32>
    %26 = arith.cmpi slt, %24, %25 : vector<8x1xi32>
    %cst_8 = arith.constant 0.000000e+00 : f32
    %27 = vector.broadcast %cst_8 : f32 to vector<8x1xf32>
    %28 = arith.select %26, %20, %27 : vector<8x1xi1>, vector<8x1xf32>
    %29 = vector.shape_cast %28 : vector<8x1xf32> to vector<1x8x1xf32>
    %cst_9 = arith.constant dense<0.000000e+00> : vector<1xf32>
    %30 = vector.multi_reduction <add>, %29, %cst_9 [1, 2] : vector<1x8x1xf32> to vector<1xf32>
    %31 = vector.shape_cast %30 : vector<1xf32> to vector<1x1x1xf32>
    %32 = vector.extract %31[0, 0, 0] : f32 from vector<1x1x1xf32>
    %33 = vector.broadcast %32 : f32 to vector<1x8x128xf32>
    %c0_10 = arith.constant 0 : index
    %c0_11 = arith.constant 0 : index
    %c0_12 = arith.constant 0 : index
    %34 = vector.load %arg3[%c0_10, %c0_11, %c0_12] : memref<1x8x128xf32, #tpu.memory_space<vmem>>, vector<1x8x128xf32>
    tpu.vector_store %arg3[%c0_10, %c0_11, %c0_12], %33 {strides = array<i32>} : memref<1x8x128xf32, #tpu.memory_space<vmem>>, vector<1x8x128xf32>,
    return
  }
  func.func @transform_0(%arg0: i32) -> (i32, i32) {
    %c0_i32 = arith.constant 0 : i32
    %c0_i32_0 = arith.constant 0 : i32
    return %arg0, %c0_i32 : i32, i32
  }
  func.func @transform_1(%arg0: i32) -> (i32, i32) {
    %c0_i32 = arith.constant 0 : i32
    %c0_i32_0 = arith.constant 0 : i32
    return %arg0, %c0_i32 : i32, i32
  }
  func.func @transform_2(%arg0: i32) -> (i32, i32, i32) {
    %c0_i32 = arith.constant 0 : i32
    %c0_i32_0 = arith.constant 0 : i32
    %c0_i32_1 = arith.constant 0 : i32
    return %arg0, %c0_i32, %c0_i32_0 : i32, i32, i32
  }
}

</mosaic_0001>

<llo_original>
// kernel: tpu_custom_call.1
$region0: #{tpu_custom_call.1}
  #allocation0 [shape = 'u32[]', space=smem, size = 0x4, offset = 0x4, fixed_abs, tag = 'smem constant byte address 0x4 - core index']
  #allocation1 [shape = 'u32[72,128]{1,0:T(1,128)}', space=vmem, size = 0x9000, scoped, tag = 'internal scratch']
  %s0 = inlined_call_operand.vmem [shape: f32[8,16], index: 0, kind: input, shape index: {}]
  %s1 = inlined_call_operand.vmem [shape: s32[8,1], index: 1, kind: input, shape index: {}]
  %s2 = inlined_call_operand.hbm [shape: f32[1,8,128], index: 2, kind: output, shape index: {}]
  %s3 = sld [smem:[#allocation0]]
  $region18: #{tpu_custom_call.1} parent=0
    _
  %s5 = ssub.s32 1, %s3
  %s6 = scalar_select 0, %s5, %s3
  $region1: #{tpu_custom_call.1} parent=0
    #allocation2 [shape = 'u8[4096]{0}', space=vmem, size = 0x1000, scoped, tag = 'output window, operand 0, single buffered']
    #allocation3 [shape = 's32[1]{0}', space=sflag, size = 0x4, scoped, tag = 'scoped memory for tpu_custom_call.1']
    %7 = vsyncpa [#allocation3], 0
    // Predicated region
    $region2: #{tpu_custom_call.1} parent=1 // pred_check
      _
    $region3: #{tpu_custom_call.1} parent=1 // pred_check_branch
      %9 = sbr.rel (0) target = $region5
    $region4: #{tpu_custom_call.1} parent=1 // pred_region
      _
    $region5: #{tpu_custom_call.1} parent=1 // pred_fallthru
      _
    // Predicated region
    $region6: #{tpu_custom_call.1} parent=1 // pred_check
      _
    $region7: #{tpu_custom_call.1} parent=1 // pred_check_branch
      %11 = sbr.rel (0) target = $region9
    $region8: #{tpu_custom_call.1} parent=1 // pred_region
      _
    $region9: #{tpu_custom_call.1} parent=1 // pred_fallthru
      _
    %v12 = vld [vmem:[%s0] sm:$0xff]
    %v13 = vld [vmem:[%s1] sm:$0xff]
    %vm14 = vcmask 130048
    %v15 = vsel %vm14, %v12, -inf
    %16 = vmax.xlane.f32.xlu0 %v15
    %v17 = vpop.xlane.xlu0 %16
    %v18 = vsub.f32 %v12, %v17
    %v19 = vmul.f32 %v18, 1.442695
    %v20 = vpow.pop %v19
    %v21 = vsel %vm14, %v20, 0.0
    %22 = vadd.xlane.f32.xlu0 %v21
    %v23 = vpop.xlane.xlu0 %22
    %v24 = vlog2.pop %v23
    %v25 = vmul.f32 %v24, 0.6931472
    %v26 = vlaneseq
    %v27 = vand.u32 %v26, 127
    %28 = vset.pattern.permute.xlu0 0
    %29 = vperm.xlu0 %28, %v13
    %v30 = vpop.permute.xlu0 %29
    %vm31 = vcmp.eq.s32.totalorder %v27, %v30
    %v32 = vsel %vm31, 0.90625, 0.00625
    %v33 = vmul.f32 %v32, %v18
    %v34 = vsel %vm14, %v33, 0.0
    %35 = vadd.xlane.f32.xlu0 %v34
    %v36 = vpop.xlane.xlu0 %35
    %v37 = vsub.f32 %v25, %v36
    %s38 = smul.u32 0, 8
    %v39 = vlaneseq
    %v40 = vshrl.u32 %v39, 7
    %v41 = vstv %s38
    %v42 = vadd.s32 %v41, %v40
    %vm43 = vcmp.lt.s32.totalorder %v42, 8
    %v44 = vsel %vm43, %v37, 0.0
    %vm45 = vcmask 7168
    %v46 = vsel %vm45, %v44, 0.0
    %47 = vadd.xlane.f32.xlu0 %v46
    %v48 = vpop.xlane.xlu0 %47
    %v49 = vrot.slane %v48, 4
    %v50 = vadd.f32 %v48, %v49
    %v51 = vrot.slane %v50, 2
    %v52 = vadd.f32 %v50, %v51
    %v53 = vrot.slane %v52, 1
    %v54 = vadd.f32 %v52, %v53
    %s55 = vtos %v54
    %v56 = vstv %s55
    %57 = vst [vmem:[#allocation2] sm:$0xff] %v56
    // Predicated region
    $region10: #{tpu_custom_call.1} parent=1 // pred_check
      _
    $region11: #{tpu_custom_call.1} parent=1 // pred_check_branch
      %59 = sbr.rel (0) target = $region13
    $region12: #{tpu_custom_call.1} parent=1 // pred_region
      %61 = vsyncadd [#allocation3], 0
      %s63 = sshll.u32 [#allocation2], 4
      %s64 = int_to_ptr.vmem [resolvable:$true] %s63
      %s65 = sshll.u32 %s2, 4
      %s66 = int_to_ptr.hbm [resolvable:$true] %s65
      %68 = dma.vmem_to_hbm [thread:$0]  %s64, 128, %s66, [#allocation3]
    $region13: #{tpu_custom_call.1} parent=1 // pred_fallthru
      _
    // Predicated region
    $region14: #{tpu_custom_call.1} parent=1 // pred_check
      _
    $region15: #{tpu_custom_call.1} parent=1 // pred_check_branch
      %70 = sbr.rel (0) target = $region17
    $region16: #{tpu_custom_call.1} parent=1 // pred_region
      %72 = dma.done [#allocation3], 128
    $region17: #{tpu_custom_call.1} parent=1 // pred_fallthru
      _
    %73 = vsyncpa [#allocation3], 1

</llo_original>
